<compile_context>
chip_gen: v6e
topology: v6e:2x2x1
jax: 0.10.0
libtpu: 0.0.40
codegen_flags: <defaults>
</compile_context>

<pallas_src>
import jax
import jax.numpy as jnp
from jax.experimental import pallas as pl
from jax.experimental.pallas import tpu as pltpu

# ----------------------------- model config ---------------------------------
INPT_DIM = 16
CTXT_DIM = 8
HDDN_DIM = 32
OUTP_DIM = 8
LIPSCHITZ_CONST = 1.0
LRELU_SLOPE = 0.1          # 'lrlu' activation = LeakyReLU(0.1)

BATCH = 16

# ----------------------------- tiling policy ---------------------------------
_MAX_TILE = 8192   # ~2-3 MiB double-buffered activations at f32; <5% of v7x's 64 MiB VMEM
_SUBLANE = 16      # multiple of 8 (f32) and 16 (bf16 sublane packing)


def _round_up(x, m):
    return ((x + m - 1) // m) * m


def _pick_batch_tile(batch):
    """Large fixed tiles with a cdiv grid; >=2 steps for mid/large batches (v7x megacore)."""
    if batch <= 256:
        # Single grid step covering everything (block == full dim is always legal).
        return batch
    # Split into (at least) two tiles so both v7x TensorCores get work, but never
    # drop below HBM-saturating DMA sizes; cap at a large fixed tile.
    tb = _round_up(pl.cdiv(batch, 2), _SUBLANE)
    return min(tb, _MAX_TILE)


# ------------------------------- kernel -------------------------------------
def _lrelu(x):
    return jnp.where(x >= 0, x, LRELU_SLOPE * x)


def dense_net_kernel(inpt_ref, ctxt_ref,
                     w0a_ref, w0b_ref, b0_ref,
                     w1_ref, b1_ref,
                     w2_ref, b2_ref,
                     o_ref):
    # Input block: concat([inpt, ctxt]) @ W0^T done as a split-K matmul
    # (no HBM-materialized concat). f32 accumulation regardless of I/O dtype.
    h = (jnp.dot(inpt_ref[...], w0a_ref[...], preferred_element_type=jnp.float32)
         + jnp.dot(ctxt_ref[...], w0b_ref[...], preferred_element_type=jnp.float32)
         + b0_ref[...])
    h = _lrelu(h)
    # Hidden block (no residual: do_res=False). Feed MXU in the weight dtype.
    h = _lrelu(jnp.dot(h.astype(w1_ref.dtype), w1_ref[...],
                       preferred_element_type=jnp.float32)
               + b1_ref[...])
    # Output block, act_o='none'; single cast at the store.
    o_ref[...] = (jnp.dot(h.astype(w2_ref.dtype), w2_ref[...],
                          preferred_element_type=jnp.float32)
                  + b2_ref[...]).astype(o_ref.dtype)


# ------------------------------ wrapper --------------------------------------
def _lipschitz_scale(wt, c):
    """Apply inf-norm Lipschitz constraint to W^T (shape (in, out)).

    The per-output-row L1 norm of W is the per-column L1 norm of W^T.
    """
    norms = jnp.sum(jnp.abs(wt), axis=0, keepdims=True)        # (1, out)
    return wt / jnp.maximum(1.0, norms / c)


def lipschitz_dense_network(inpt, ctxt, params, *, batch_tile=None):
    """Forward pass. inpt: (B, INPT_DIM), ctxt: (B, CTXT_DIM) -> (B, OUTP_DIM).

    Output dtype follows inpt.dtype (f32 or bf16); accumulation is always f32.
    """
    b = inpt.shape[0]
    act_dtype = inpt.dtype
    (w0t, b0), (w1t, b1), (w2t, b2) = params

    # Lipschitz normalization is grid-invariant: do it once here (in f32), not per tile.
    w0t = _lipschitz_scale(w0t, LIPSCHITZ_CONST)
    w1t = _lipschitz_scale(w1t, LIPSCHITZ_CONST)
    w2t = _lipschitz_scale(w2t, LIPSCHITZ_CONST)
    # Split the first layer's K dimension so inpt/ctxt feed the kernel directly.
    w0a, w0b = w0t[:INPT_DIM], w0t[INPT_DIM:]

    # MXU inputs in the activation dtype (bf16 path halves bytes); biases stay f32
    # so the elementwise bias-add / lrelu path is f32 everywhere (v5e-safe).
    w0a, w0b, w1t, w2t = (w.astype(act_dtype) for w in (w0a, w0b, w1t, w2t))
    b0, b1, b2 = (x.astype(jnp.float32) for x in (b0, b1, b2))

    tb = batch_tile if batch_tile is not None else _pick_batch_tile(b)
    grid = (pl.cdiv(b, tb),)   # ragged tail allowed: rows are independent

    def const_spec(arr):
        return pl.BlockSpec(arr.shape, lambda i: (0, 0))

    return pl.pallas_call(
        dense_net_kernel,
        out_shape=jax.ShapeDtypeStruct((b, OUTP_DIM), act_dtype),
        grid=grid,
        in_specs=[
            pl.BlockSpec((tb, INPT_DIM), lambda i: (i, 0)),     # inpt tile
            pl.BlockSpec((tb, CTXT_DIM), lambda i: (i, 0)),     # ctxt tile
            const_spec(w0a), const_spec(w0b), const_spec(b0),
            const_spec(w1t), const_spec(b1),
            const_spec(w2t), const_spec(b2),
        ],
        out_specs=pl.BlockSpec((tb, OUTP_DIM), lambda i: (i, 0)),
        compiler_params=pltpu.CompilerParams(
            dimension_semantics=("parallel",)),
    )(inpt, ctxt, w0a, w0b, b0, w1t, b1, w2t, b2)


# --------------------------- parameter init ----------------------------------
def init_linear(key, fan_in, fan_out):
    """Deterministic init mimicking nn.Linear (uniform +/- 1/sqrt(fan_in)).

    Returns (W^T, bias) with W^T: (fan_in, fan_out), bias: (1, fan_out).
    """
    kw, kb = jax.random.split(key)
    bound = 1.0 / jnp.sqrt(fan_in)
    w = jax.random.uniform(kw, (fan_out, fan_in), jnp.float32, -bound, bound)
    b = jax.random.uniform(kb, (fan_out,), jnp.float32, -bound, bound)
    return w.T, b.reshape(1, fan_out)


def make_params(key):
    k0, k1, k2 = jax.random.split(key, 3)
    return (
        init_linear(k0, INPT_DIM + CTXT_DIM, HDDN_DIM),   # input block
        init_linear(k1, HDDN_DIM, HDDN_DIM),              # hidden block
        init_linear(k2, HDDN_DIM, OUTP_DIM),              # output block
    )


# ------------------------- pure-JAX reference --------------------------------
def reference_forward(inpt, ctxt, params):
    def lip_lin(x, wt, b):
        norms = jnp.sum(jnp.abs(wt), axis=0, keepdims=True)
        wt = wt / jnp.maximum(1.0, norms / LIPSCHITZ_CONST)
        return x @ wt + b

    lrelu = lambda x: jnp.where(x >= 0, x, LRELU_SLOPE * x)
    (w0t, b0), (w1t, b1), (w2t, b2) = params
    x = jnp.concatenate([inpt, ctxt], axis=-1)
    h = lrelu(lip_lin(x, w0t, b0))
    h = lrelu(lip_lin(h, w1t, b1))
    return lip_lin(h, w2t, b2)


# --------------------------------- main ---------------------------------------
if __name__ == "__main__":
    key = jax.random.PRNGKey(0)
    k_in, k_ctxt, k_params = jax.random.split(key, 3)

    params = make_params(k_params)

    # 1) Small f32 smoke test (single grid step), tight tolerance.
    inpt = jax.random.normal(k_in, (BATCH, INPT_DIM), jnp.float32)
    ctxt = jax.random.normal(k_ctxt, (BATCH, CTXT_DIM), jnp.float32)
    out = jax.block_until_ready(lipschitz_dense_network(inpt, ctxt, params))
    ref = jax.block_until_ready(reference_forward(inpt, ctxt, params))
    assert out.shape == (BATCH, OUTP_DIM), out.shape
    assert jnp.allclose(out, ref, atol=1e-5, rtol=1e-5), "f32 mismatch vs reference"

    # 2) Multi-step cdiv grid with a ragged tail (B=40, tile=16 -> 3 steps, last partial).
    b2 = 40
    inpt2 = jax.random.normal(k_in, (b2, INPT_DIM), jnp.float32)
    ctxt2 = jax.random.normal(k_ctxt, (b2, CTXT_DIM), jnp.float32)
    out2 = jax.block_until_ready(
        lipschitz_dense_network(inpt2, ctxt2, params, batch_tile=16))
    ref2 = reference_forward(inpt2, ctxt2, params)
    assert out2.shape == (b2, OUTP_DIM), out2.shape
    assert jnp.allclose(out2, ref2, atol=1e-5, rtol=1e-5), "ragged-grid mismatch"

    # 3) bf16 activation I/O (f32 accumulation in-kernel); loosened tolerance.
    out3 = jax.block_until_ready(
        lipschitz_dense_network(inpt.astype(jnp.bfloat16),
                                ctxt.astype(jnp.bfloat16), params))
    assert out3.dtype == jnp.bfloat16
    assert jnp.allclose(out3.astype(jnp.float32), ref, atol=1e-1, rtol=5e-2), \
        "bf16 mismatch vs f32 reference"

    print("KERNEL_OK")
</pallas_src>

<mosaic_0001>
module attributes {stable_mosaic.version = 11 : i64} {
  func.func @dense_net_kernel(%arg0: i32, %arg1: memref<16x16xf32, #tpu.memory_space<vmem>>, %arg2: memref<16x8xf32, #tpu.memory_space<vmem>>, %arg3: memref<16x32xf32, #tpu.memory_space<vmem>>, %arg4: memref<8x32xf32, #tpu.memory_space<vmem>>, %arg5: memref<1x32xf32, #tpu.memory_space<vmem>>, %arg6: memref<32x32xf32, #tpu.memory_space<vmem>>, %arg7: memref<1x32xf32, #tpu.memory_space<vmem>>, %arg8: memref<32x8xf32, #tpu.memory_space<vmem>>, %arg9: memref<1x8xf32, #tpu.memory_space<vmem>>, %arg10: memref<16x8xf32, #tpu.memory_space<vmem>>) attributes {dimension_semantics = [#tpu.dimension_semantics<parallel>], iteration_bounds = array<i64: 1>, scalar_prefetch = 0 : i64, scratch_operands = 0 : i64, tpu.core_type = #tpu.core_type<tc>, window_params = [{transform_indices = @transform_0, window_bounds = array<i64: 16, 16>}, {transform_indices = @transform_1, window_bounds = array<i64: 16, 8>}, {pipeline_mode = #tpu.pipeline_mode<synchronous>, transform_indices = @transform_2, window_bounds = array<i64: 16, 32>}, {pipeline_mode = #tpu.pipeline_mode<synchronous>, transform_indices = @transform_3, window_bounds = array<i64: 8, 32>}, {pipeline_mode = #tpu.pipeline_mode<synchronous>, transform_indices = @transform_4, window_bounds = array<i64: 1, 32>}, {pipeline_mode = #tpu.pipeline_mode<synchronous>, transform_indices = @transform_5, window_bounds = array<i64: 32, 32>}, {pipeline_mode = #tpu.pipeline_mode<synchronous>, transform_indices = @transform_6, window_bounds = array<i64: 1, 32>}, {pipeline_mode = #tpu.pipeline_mode<synchronous>, transform_indices = @transform_7, window_bounds = array<i64: 32, 8>}, {pipeline_mode = #tpu.pipeline_mode<synchronous>, transform_indices = @transform_8, window_bounds = array<i64: 1, 8>}, {transform_indices = @transform_9, window_bounds = array<i64: 16, 8>}]} {
    %c0 = arith.constant 0 : index
    %c0_0 = arith.constant 0 : index
    %0 = vector.load %arg1[%c0, %c0_0] : memref<16x16xf32, #tpu.memory_space<vmem>>, vector<16x16xf32>
    %c0_1 = arith.constant 0 : index
    %c0_2 = arith.constant 0 : index
    %1 = vector.load %arg3[%c0_1, %c0_2] : memref<16x32xf32, #tpu.memory_space<vmem>>, vector<16x32xf32>
    %cst = arith.constant dense<0.000000e+00> : vector<16x32xf32>
    %2 = tpu.matmul %0, %1, %cst {dimension_numbers = #tpu.dot_dimension_numbers<[1], [0], [0], [1], [0, 0, 1, 1], [], []>} : vector<16x16xf32>, vector<16x32xf32>, vector<16x32xf32> -> vector<16x32xf32>
    %c0_3 = arith.constant 0 : index
    %c0_4 = arith.constant 0 : index
    %3 = vector.load %arg2[%c0_3, %c0_4] : memref<16x8xf32, #tpu.memory_space<vmem>>, vector<16x8xf32>
    %c0_5 = arith.constant 0 : index
    %c0_6 = arith.constant 0 : index
    %4 = vector.load %arg4[%c0_5, %c0_6] : memref<8x32xf32, #tpu.memory_space<vmem>>, vector<8x32xf32>
    %cst_7 = arith.constant dense<0.000000e+00> : vector<16x32xf32>
    %5 = tpu.matmul %3, %4, %cst_7 {dimension_numbers = #tpu.dot_dimension_numbers<[1], [0], [0], [1], [0, 0, 1, 1], [], []>} : vector<16x8xf32>, vector<8x32xf32>, vector<16x32xf32> -> vector<16x32xf32>
    %6 = arith.addf %2, %5 : vector<16x32xf32>
    %c0_8 = arith.constant 0 : index
    %c0_9 = arith.constant 0 : index
    %7 = vector.load %arg5[%c0_8, %c0_9] : memref<1x32xf32, #tpu.memory_space<vmem>>, vector<1x32xf32>
    %8 = vector.broadcast %7 : vector<1x32xf32> to vector<16x32xf32>
    %9 = arith.addf %6, %8 : vector<16x32xf32>
    %cst_10 = arith.constant 0.000000e+00 : f32
    %10 = vector.broadcast %cst_10 : f32 to vector<16x32xf32>
    %11 = arith.cmpf oge, %9, %10 : vector<16x32xf32>
    %cst_11 = arith.constant 1.000000e-01 : f32
    %12 = vector.broadcast %cst_11 : f32 to vector<16x32xf32>
    %13 = arith.mulf %12, %9 : vector<16x32xf32>
    %14 = arith.select %11, %9, %13 : vector<16x32xi1>, vector<16x32xf32>
    %c0_12 = arith.constant 0 : index
    %c0_13 = arith.constant 0 : index
    %15 = vector.load %arg6[%c0_12, %c0_13] : memref<32x32xf32, #tpu.memory_space<vmem>>, vector<32x32xf32>
    %cst_14 = arith.constant dense<0.000000e+00> : vector<16x32xf32>
    %16 = tpu.matmul %14, %15, %cst_14 {dimension_numbers = #tpu.dot_dimension_numbers<[1], [0], [0], [1], [0, 0, 1, 1], [], []>} : vector<16x32xf32>, vector<32x32xf32>, vector<16x32xf32> -> vector<16x32xf32>
    %c0_15 = arith.constant 0 : index
    %c0_16 = arith.constant 0 : index
    %17 = vector.load %arg7[%c0_15, %c0_16] : memref<1x32xf32, #tpu.memory_space<vmem>>, vector<1x32xf32>
    %18 = vector.broadcast %17 : vector<1x32xf32> to vector<16x32xf32>
    %19 = arith.addf %16, %18 : vector<16x32xf32>
    %cst_17 = arith.constant 0.000000e+00 : f32
    %20 = vector.broadcast %cst_17 : f32 to vector<16x32xf32>
    %21 = arith.cmpf oge, %19, %20 : vector<16x32xf32>
    %cst_18 = arith.constant 1.000000e-01 : f32
    %22 = vector.broadcast %cst_18 : f32 to vector<16x32xf32>
    %23 = arith.mulf %22, %19 : vector<16x32xf32>
    %24 = arith.select %21, %19, %23 : vector<16x32xi1>, vector<16x32xf32>
    %c0_19 = arith.constant 0 : index
    %c0_20 = arith.constant 0 : index
    %25 = vector.load %arg8[%c0_19, %c0_20] : memref<32x8xf32, #tpu.memory_space<vmem>>, vector<32x8xf32>
    %cst_21 = arith.constant dense<0.000000e+00> : vector<16x8xf32>
    %26 = tpu.matmul %24, %25, %cst_21 {dimension_numbers = #tpu.dot_dimension_numbers<[1], [0], [0], [1], [0, 0, 1, 1], [], []>} : vector<16x32xf32>, vector<32x8xf32>, vector<16x8xf32> -> vector<16x8xf32>
    %c0_22 = arith.constant 0 : index
    %c0_23 = arith.constant 0 : index
    %27 = vector.load %arg9[%c0_22, %c0_23] : memref<1x8xf32, #tpu.memory_space<vmem>>, vector<1x8xf32>
    %28 = vector.broadcast %27 : vector<1x8xf32> to vector<16x8xf32>
    %29 = arith.addf %26, %28 : vector<16x8xf32>
    %c0_24 = arith.constant 0 : index
    %c0_25 = arith.constant 0 : index
    %30 = vector.load %arg10[%c0_24, %c0_25] : memref<16x8xf32, #tpu.memory_space<vmem>>, vector<16x8xf32>
    tpu.vector_store %arg10[%c0_24, %c0_25], %29 {strides = array<i32>} : memref<16x8xf32, #tpu.memory_space<vmem>>, vector<16x8xf32>,
    return
  }
  func.func @transform_0(%arg0: i32) -> (i32, i32) {
    %c0_i32 = arith.constant 0 : i32
    %c0_i32_0 = arith.constant 0 : i32
    return %arg0, %c0_i32 : i32, i32
  }
  func.func @transform_1(%arg0: i32) -> (i32, i32) {
    %c0_i32 = arith.constant 0 : i32
    %c0_i32_0 = arith.constant 0 : i32
    return %arg0, %c0_i32 : i32, i32
  }
  func.func @transform_2(%arg0: i32) -> (i32, i32) {
    %c0_i32 = arith.constant 0 : i32
    %c0_i32_0 = arith.constant 0 : i32
    %c0_i32_1 = arith.constant 0 : i32
    return %c0_i32, %c0_i32_0 : i32, i32
  }
  func.func @transform_3(%arg0: i32) -> (i32, i32) {
    %c0_i32 = arith.constant 0 : i32
    %c0_i32_0 = arith.constant 0 : i32
    %c0_i32_1 = arith.constant 0 : i32
    return %c0_i32, %c0_i32_0 : i32, i32
  }
  func.func @transform_4(%arg0: i32) -> (i32, i32) {
    %c0_i32 = arith.constant 0 : i32
    %c0_i32_0 = arith.constant 0 : i32
    %c0_i32_1 = arith.constant 0 : i32
    return %c0_i32, %c0_i32_0 : i32, i32
  }
  func.func @transform_5(%arg0: i32) -> (i32, i32) {
    %c0_i32 = arith.constant 0 : i32
    %c0_i32_0 = arith.constant 0 : i32
    %c0_i32_1 = arith.constant 0 : i32
    return %c0_i32, %c0_i32_0 : i32, i32
  }
  func.func @transform_6(%arg0: i32) -> (i32, i32) {
    %c0_i32 = arith.constant 0 : i32
    %c0_i32_0 = arith.constant 0 : i32
    %c0_i32_1 = arith.constant 0 : i32
    return %c0_i32, %c0_i32_0 : i32, i32
  }
  func.func @transform_7(%arg0: i32) -> (i32, i32) {
    %c0_i32 = arith.constant 0 : i32
    %c0_i32_0 = arith.constant 0 : i32
    %c0_i32_1 = arith.constant 0 : i32
    return %c0_i32, %c0_i32_0 : i32, i32
  }
  func.func @transform_8(%arg0: i32) -> (i32, i32) {
    %c0_i32 = arith.constant 0 : i32
    %c0_i32_0 = arith.constant 0 : i32
    %c0_i32_1 = arith.constant 0 : i32
    return %c0_i32, %c0_i32_0 : i32, i32
  }
  func.func @transform_9(%arg0: i32) -> (i32, i32) {
    %c0_i32 = arith.constant 0 : i32
    %c0_i32_0 = arith.constant 0 : i32
    return %arg0, %c0_i32 : i32, i32
  }
}

</mosaic_0001>

<llo_original>
// kernel: tpu_custom_call.1
$region0: #{tpu_custom_call.1}
  #allocation0 [shape = 'u32[]', space=smem, size = 0x4, offset = 0x4, fixed_abs, tag = 'smem constant byte address 0x4 - core index']
  #allocation1 [shape = 'u32[144,128]{1,0:T(1,128)}', space=vmem, size = 0x12000, scoped, tag = 'internal scratch']
  %s0 = inlined_call_operand.vmem [shape: f32[16,16], index: 0, kind: input, shape index: {}]
  %s1 = inlined_call_operand.vmem [shape: f32[16,8], index: 1, kind: input, shape index: {}]
  %s2 = inlined_call_operand.vmem [shape: f32[16,32], index: 2, kind: input, shape index: {}]
  %s3 = inlined_call_operand.hbm [shape: f32[8,32], index: 3, kind: input, shape index: {}]
  %s4 = inlined_call_operand.vmem [shape: f32[1,32], index: 4, kind: input, shape index: {}]
  %s5 = inlined_call_operand.vmem [shape: f32[32,32], index: 5, kind: input, shape index: {}]
  %s6 = inlined_call_operand.vmem [shape: f32[1,32], index: 6, kind: input, shape index: {}]
  %s7 = inlined_call_operand.vmem [shape: f32[32,8], index: 7, kind: input, shape index: {}]
  %s8 = inlined_call_operand.vmem [shape: f32[1,8], index: 8, kind: input, shape index: {}]
  %s9 = inlined_call_operand.vmem [shape: f32[16,8], index: 9, kind: output, shape index: {}]
  %s10 = sld [smem:[#allocation0]]
  $region50: #{tpu_custom_call.1} parent=0
    _
  %s12 = ssub.s32 1, %s10
  %s13 = scalar_select 0, %s12, %s10
  $region1: #{tpu_custom_call.1} parent=0
    #allocation2 [shape = 'u8[4096]{0}', space=vmem, size = 0x1000, scoped, tag = 'input window, operand 3, single buffered']
    #allocation3 [shape = 's32[1]{0}', space=sflag, size = 0x4, scoped, tag = 'scoped memory for tpu_custom_call.1']
    %14 = vsyncpa [#allocation3], 0
    // Predicated region
    $region2: #{tpu_custom_call.1} parent=1 // pred_check
      _
    $region3: #{tpu_custom_call.1} parent=1 // pred_check_branch
      %16 = sbr.rel (0) target = $region5
    $region4: #{tpu_custom_call.1} parent=1 // pred_region
      _
    $region5: #{tpu_custom_call.1} parent=1 // pred_fallthru
      _
    // Predicated region
    $region6: #{tpu_custom_call.1} parent=1 // pred_check
      _
    $region7: #{tpu_custom_call.1} parent=1 // pred_check_branch
      %18 = sbr.rel (0) target = $region9
    $region8: #{tpu_custom_call.1} parent=1 // pred_region
      _
    $region9: #{tpu_custom_call.1} parent=1 // pred_fallthru
      _
    // Predicated region
    $region10: #{tpu_custom_call.1} parent=1 // pred_check
      _
    $region11: #{tpu_custom_call.1} parent=1 // pred_check_branch
      %20 = sbr.rel (0) target = $region13
    $region12: #{tpu_custom_call.1} parent=1 // pred_region
      _
    $region13: #{tpu_custom_call.1} parent=1 // pred_fallthru
      _
    // Predicated region
    $region14: #{tpu_custom_call.1} parent=1 // pred_check
      _
    $region15: #{tpu_custom_call.1} parent=1 // pred_check_branch
      %22 = sbr.rel (0) target = $region17
    $region16: #{tpu_custom_call.1} parent=1 // pred_region
      %s24 = ssub.s32 128, 128
      %25 = vsyncadd [#allocation3], %s24
      %s27 = sshll.u32 [#allocation2], 4
      %s28 = int_to_ptr.vmem [resolvable:$true] %s27
      %30 = dma.hbm_to_vmem [thread:$0]  %s3, 128, %s28, [#allocation3]
    $region17: #{tpu_custom_call.1} parent=1 // pred_fallthru
      _
    // Predicated region
    $region18: #{tpu_custom_call.1} parent=1 // pred_check
      _
    $region19: #{tpu_custom_call.1} parent=1 // pred_check_branch
      %32 = sbr.rel (0) target = $region21
    $region20: #{tpu_custom_call.1} parent=1 // pred_region
      _
    $region21: #{tpu_custom_call.1} parent=1 // pred_fallthru
      _
    // Predicated region
    $region22: #{tpu_custom_call.1} parent=1 // pred_check
      _
    $region23: #{tpu_custom_call.1} parent=1 // pred_check_branch
      %34 = sbr.rel (0) target = $region25
    $region24: #{tpu_custom_call.1} parent=1 // pred_region
      _
    $region25: #{tpu_custom_call.1} parent=1 // pred_fallthru
      _
    // Predicated region
    $region26: #{tpu_custom_call.1} parent=1 // pred_check
      _
    $region27: #{tpu_custom_call.1} parent=1 // pred_check_branch
      %36 = sbr.rel (0) target = $region29
    $region28: #{tpu_custom_call.1} parent=1 // pred_region
      _
    $region29: #{tpu_custom_call.1} parent=1 // pred_fallthru
      _
    // Predicated region
    $region30: #{tpu_custom_call.1} parent=1 // pred_check
      _
    $region31: #{tpu_custom_call.1} parent=1 // pred_check_branch
      %38 = sbr.rel (0) target = $region33
    $region32: #{tpu_custom_call.1} parent=1 // pred_region
      _
    $region33: #{tpu_custom_call.1} parent=1 // pred_fallthru
      _
    // Predicated region
    $region34: #{tpu_custom_call.1} parent=1 // pred_check
      _
    $region35: #{tpu_custom_call.1} parent=1 // pred_check_branch
      %40 = sbr.rel (0) target = $region37
    $region36: #{tpu_custom_call.1} parent=1 // pred_region
      _
    $region37: #{tpu_custom_call.1} parent=1 // pred_fallthru
      _
    // Predicated region
    $region38: #{tpu_custom_call.1} parent=1 // pred_check
      _
    $region39: #{tpu_custom_call.1} parent=1 // pred_check_branch
      %42 = sbr.rel (0) target = $region41
    $region40: #{tpu_custom_call.1} parent=1 // pred_region
      %43 = dma.done [#allocation3], 128
    $region41: #{tpu_custom_call.1} parent=1 // pred_fallthru
      _
    %v44 = vld [vmem:[%s0] sm:$0xff]
    %v45 = vld [vmem:[%s0 + $0x8] sm:$0xff]
    %v46 = vld [vmem:[%s2] sm:$0xff]
    %v47 = vld [vmem:[%s2 + $0x8] sm:$0xff]
    %v48 = vld [vmem:[%s1] sm:$0xff]
    %v49 = vld [vmem:[%s1 + $0x8] sm:$0xff]
    %v50 = vld [vmem:[#allocation2] sm:$0xff]
    %vm51 = vcmask 64512
    %v53 = vsel %vm51, %v48, 0
    %v56 = vsel %vm51, %v49, 0
    %58 = vmatprep.subr.mxu0 0.0
    %59 = vmatpush1.msra.mxu0 0.0
    %60 = vmatprep.subr.mxu0 0.0
    %61 = vmatpush1.msra.mxu0 0.0
    %62 = vmatprep.subr.mxu0 0.0
    %63 = vmatpush1.msra.mxu0 0.0
    %64 = vmatprep.subr.mxu0 0.0
    %65 = vmatpush1.msra.mxu0 0.0
    %66 = vmatprep.subr.mxu0 0.0
    %67 = vmatpush1.msra.mxu0 0.0
    %68 = vmatprep.subr.mxu0 0.0
    %69 = vmatpush1.msra.mxu0 0.0
    %70 = vmatprep.subr.mxu0 0.0
    %71 = vmatpush1.msra.mxu0 0.0
    %72 = vmatprep.subr.mxu0 0.0
    %73 = vmatpush1.msra.mxu0 0.0
    %74 = vmatprep.subr.mxu0 0.0
    %75 = vmatpush1.msra.mxu0 0.0
    %76 = vmatprep.subr.mxu0 0.0
    %77 = vmatpush1.msra.mxu0 0.0
    %78 = vmatprep.subr.mxu0 0.0
    %79 = vmatpush1.msra.mxu0 0.0
    %80 = vmatprep.subr.mxu0 0.0
    %81 = vmatpush1.msra.mxu0 0.0
    %82 = vmatprep.subr.mxu0 0.0
    %83 = vmatpush1.msra.mxu0 0.0
    %84 = vmatprep.subr.mxu0 0.0
    %85 = vmatpush1.msra.mxu0 0.0
    %86 = vmatprep.subr.mxu0 0.0
    %87 = vmatpush1.msra.mxu0 0.0
    %88 = vmatprep.subr.mxu0 0.0
    %89 = vmatpush1.msra.mxu0 %v50
    %90 = vmatprep.subr.mxu0 0.0
    %91 = vmatpush2.msra.mxu0 0.0
    %92 = vmatprep.subr.mxu0 0.0
    %93 = vmatpush2.msra.mxu0 0.0
    %94 = vmatprep.subr.mxu0 0.0
    %95 = vmatpush2.msra.mxu0 0.0
    %96 = vmatprep.subr.mxu0 0.0
    %97 = vmatpush2.msra.mxu0 0.0
    %98 = vmatprep.subr.mxu0 0.0
    %99 = vmatpush2.msra.mxu0 0.0
    %100 = vmatprep.subr.mxu0 0.0
    %101 = vmatpush2.msra.mxu0 0.0
    %102 = vmatprep.subr.mxu0 0.0
    %103 = vmatpush2.msra.mxu0 0.0
    %104 = vmatprep.subr.mxu0 0.0
    %105 = vmatpush2.msra.mxu0 0.0
    %106 = vmatprep.subr.mxu0 0.0
    %107 = vmatpush2.msra.mxu0 0.0
    %108 = vmatprep.subr.mxu0 0.0
    %109 = vmatpush2.msra.mxu0 0.0
    %110 = vmatprep.subr.mxu0 0.0
    %111 = vmatpush2.msra.mxu0 0.0
    %112 = vmatprep.subr.mxu0 0.0
    %113 = vmatpush2.msra.mxu0 0.0
    %114 = vmatprep.subr.mxu0 0.0
    %115 = vmatpush2.msra.mxu0 0.0
    %116 = vmatprep.subr.mxu0 0.0
    %117 = vmatpush2.msra.mxu0 0.0
    %118 = vmatprep.subr.mxu0 0.0
    %119 = vmatpush2.msra.mxu0 0.0
    %120 = vmatprep.subr.mxu0 0.0
    %121 = vmatpush2.msra.mxu0 0.0
    %122 = vmatprep.mubr.f32.mxu0 0.0
    %123 = vmatmul.mubr.f32.gmra.mxu0 %v53
    %v124 = vpop.f32.mrf.mxu0
    %v125 = vadd.f32 0.0, %v124
    %v126 = vpop.f32.mrf.mxu0
    %127 = vmatprep.mubr.f32.mxu0 0.0
    %128 = vmatmul.mubr.f32.gmra.mxu0 %v56
    %v129 = vpop.f32.mrf.mxu0
    %v130 = vadd.f32 0.0, %v129
    %v131 = vpop.f32.mrf.mxu0
    %132 = vdwg.mxu0
    %vm133 = vcmask 130048
    %v135 = vsel %vm133, %v44, 0
    %v138 = vsel %vm133, %v45, 0
    %140 = vmatprep.subr.mxu0 0.0
    %141 = vmatpush1.msra.mxu0 0.0
    %142 = vmatprep.subr.mxu0 0.0
    %143 = vmatpush1.msra.mxu0 0.0
    %144 = vmatprep.subr.mxu0 0.0
    %145 = vmatpush1.msra.mxu0 0.0
    %146 = vmatprep.subr.mxu0 0.0
    %147 = vmatpush1.msra.mxu0 0.0
    %148 = vmatprep.subr.mxu0 0.0
    %149 = vmatpush1.msra.mxu0 0.0
    %150 = vmatprep.subr.mxu0 0.0
    %151 = vmatpush1.msra.mxu0 0.0
    %152 = vmatprep.subr.mxu0 0.0
    %153 = vmatpush1.msra.mxu0 0.0
    %154 = vmatprep.subr.mxu0 0.0
    %155 = vmatpush1.msra.mxu0 0.0
    %156 = vmatprep.subr.mxu0 0.0
    %157 = vmatpush1.msra.mxu0 0.0
    %158 = vmatprep.subr.mxu0 0.0
    %159 = vmatpush1.msra.mxu0 0.0
    %160 = vmatprep.subr.mxu0 0.0
    %161 = vmatpush1.msra.mxu0 0.0
    %162 = vmatprep.subr.mxu0 0.0
    %163 = vmatpush1.msra.mxu0 0.0
    %164 = vmatprep.subr.mxu0 0.0
    %165 = vmatpush1.msra.mxu0 0.0
    %166 = vmatprep.subr.mxu0 0.0
    %167 = vmatpush1.msra.mxu0 0.0
    %168 = vmatprep.subr.mxu0 0.0
    %169 = vmatpush1.msra.mxu0 %v47
    %170 = vmatprep.subr.mxu0 0.0
    %171 = vmatpush1.msra.mxu0 %v46
    %172 = vmatprep.subr.mxu0 0.0
    %173 = vmatpush2.msra.mxu0 0.0
    %174 = vmatprep.subr.mxu0 0.0
    %175 = vmatpush2.msra.mxu0 0.0
    %176 = vmatprep.subr.mxu0 0.0
    %177 = vmatpush2.msra.mxu0 0.0
    %178 = vmatprep.subr.mxu0 0.0
    %179 = vmatpush2.msra.mxu0 0.0
    %180 = vmatprep.subr.mxu0 0.0
    %181 = vmatpush2.msra.mxu0 0.0
    %182 = vmatprep.subr.mxu0 0.0
    %183 = vmatpush2.msra.mxu0 0.0
    %184 = vmatprep.subr.mxu0 0.0
    %185 = vmatpush2.msra.mxu0 0.0
    %186 = vmatprep.subr.mxu0 0.0
    %187 = vmatpush2.msra.mxu0 0.0
    %188 = vmatprep.subr.mxu0 0.0
    %189 = vmatpush2.msra.mxu0 0.0
    %190 = vmatprep.subr.mxu0 0.0
    %191 = vmatpush2.msra.mxu0 0.0
    %192 = vmatprep.subr.mxu0 0.0
    %193 = vmatpush2.msra.mxu0 0.0
    %194 = vmatprep.subr.mxu0 0.0
    %195 = vmatpush2.msra.mxu0 0.0
    %196 = vmatprep.subr.mxu0 0.0
    %197 = vmatpush2.msra.mxu0 0.0
    %198 = vmatprep.subr.mxu0 0.0
    %199 = vmatpush2.msra.mxu0 0.0
    %200 = vmatprep.subr.mxu0 0.0
    %201 = vmatpush2.msra.mxu0 0.0
    %202 = vmatprep.subr.mxu0 0.0
    %203 = vmatpush2.msra.mxu0 0.0
    %204 = vmatprep.mubr.f32.mxu0 0.0
    %205 = vmatmul.mubr.f32.gmra.mxu0 %v135
    %v206 = vpop.f32.mrf.mxu0
    %v207 = vadd.f32 %v125, %v206
    %v208 = vpop.f32.mrf.mxu0
    %209 = vmatprep.mubr.f32.mxu0 0.0
    %210 = vmatmul.mubr.f32.gmra.mxu0 %v138
    %v211 = vpop.f32.mrf.mxu0
    %v212 = vadd.f32 %v130, %v211
    %v213 = vpop.f32.mrf.mxu0
    %214 = vdwg.mxu0
    %v215 = vld [vmem:[%s4] sm:$0x1]
    %v217 = vlaneseq
    %v218 = vshrl.u32 %v217, 7
    %v219 = vsub.s32 0, %v218
    %v220 = vrot.slane %v215, %v219
    %v222 = vadd.f32 %v207, %v220
    %v223 = vadd.f32 %v212, %v220
    %vm224 = vcmp.ge.f32.partialorder %v222, 0.0
    %vm225 = vcmp.ge.f32.partialorder %v223, 0.0
    %v226 = vmul.f32 %v222, 0.1
    %v227 = vmul.f32 %v223, 0.1
    %v228 = vsel %vm224, %v222, %v226
    %v229 = vsel %vm225, %v223, %v227
    %v230 = vld [vmem:[%s5] sm:$0xff]
    %v231 = vld [vmem:[%s5 + $0x8] sm:$0xff]
    %v232 = vld [vmem:[%s5 + $0x10] sm:$0xff]
    %v233 = vld [vmem:[%s5 + $0x18] sm:$0xff]
    %v234 = vld [vmem:[%s6] sm:$0x1]
    %v236 = vlaneseq
    %v237 = vshrl.u32 %v236, 7
    %v238 = vsub.s32 0, %v237
    %v239 = vrot.slane %v234, %v238
    %vm241 = vcmask 261120
    %v243 = vsel %vm241, %v228, 0
    %v246 = vsel %vm241, %v229, 0
    %248 = vmatprep.subr.mxu0 0.0
    %249 = vmatpush1.msra.mxu0 0.0
    %250 = vmatprep.subr.mxu0 0.0
    %251 = vmatpush1.msra.mxu0 0.0
    %252 = vmatprep.subr.mxu0 0.0
    %253 = vmatpush1.msra.mxu0 0.0
    %254 = vmatprep.subr.mxu0 0.0
    %255 = vmatpush1.msra.mxu0 0.0
    %256 = vmatprep.subr.mxu0 0.0
    %257 = vmatpush1.msra.mxu0 0.0
    %258 = vmatprep.subr.mxu0 0.0
    %259 = vmatpush1.msra.mxu0 0.0
    %260 = vmatprep.subr.mxu0 0.0
    %261 = vmatpush1.msra.mxu0 0.0
    %262 = vmatprep.subr.mxu0 0.0
    %263 = vmatpush1.msra.mxu0 0.0
    %264 = vmatprep.subr.mxu0 0.0
    %265 = vmatpush1.msra.mxu0 0.0
    %266 = vmatprep.subr.mxu0 0.0
    %267 = vmatpush1.msra.mxu0 0.0
    %268 = vmatprep.subr.mxu0 0.0
    %269 = vmatpush1.msra.mxu0 0.0
    %270 = vmatprep.subr.mxu0 0.0
    %271 = vmatpush1.msra.mxu0 0.0
    %272 = vmatprep.subr.mxu0 0.0
    %273 = vmatpush1.msra.mxu0 %v233
    %274 = vmatprep.subr.mxu0 0.0
    %275 = vmatpush1.msra.mxu0 %v232
    %276 = vmatprep.subr.mxu0 0.0
    %277 = vmatpush1.msra.mxu0 %v231
    %278 = vmatprep.subr.mxu0 0.0
    %279 = vmatpush1.msra.mxu0 %v230
    %280 = vmatprep.subr.mxu0 0.0
    %281 = vmatpush2.msra.mxu0 0.0
    %282 = vmatprep.subr.mxu0 0.0
    %283 = vmatpush2.msra.mxu0 0.0
    %284 = vmatprep.subr.mxu0 0.0
    %285 = vmatpush2.msra.mxu0 0.0
    %286 = vmatprep.subr.mxu0 0.0
    %287 = vmatpush2.msra.mxu0 0.0
    %288 = vmatprep.subr.mxu0 0.0
    %289 = vmatpush2.msra.mxu0 0.0
    %290 = vmatprep.subr.mxu0 0.0
    %291 = vmatpush2.msra.mxu0 0.0
    %292 = vmatprep.subr.mxu0 0.0
    %293 = vmatpush2.msra.mxu0 0.0
    %294 = vmatprep.subr.mxu0 0.0
    %295 = vmatpush2.msra.mxu0 0.0
    %296 = vmatprep.subr.mxu0 0.0
    %297 = vmatpush2.msra.mxu0 0.0
    %298 = vmatprep.subr.mxu0 0.0
    %299 = vmatpush2.msra.mxu0 0.0
    %300 = vmatprep.subr.mxu0 0.0
    %301 = vmatpush2.msra.mxu0 0.0
    %302 = vmatprep.subr.mxu0 0.0
    %303 = vmatpush2.msra.mxu0 0.0
    %304 = vmatprep.subr.mxu0 0.0
    %305 = vmatpush2.msra.mxu0 0.0
    %306 = vmatprep.subr.mxu0 0.0
    %307 = vmatpush2.msra.mxu0 0.0
    %308 = vmatprep.subr.mxu0 0.0
    %309 = vmatpush2.msra.mxu0 0.0
    %310 = vmatprep.subr.mxu0 0.0
    %311 = vmatpush2.msra.mxu0 0.0
    %312 = vmatprep.mubr.f32.mxu0 0.0
    %313 = vmatmul.mubr.f32.gmra.mxu0 %v243
    %v314 = vpop.f32.mrf.mxu0
    %v315 = vadd.f32 %v239, %v314
    %v316 = vpop.f32.mrf.mxu0
    %317 = vmatprep.mubr.f32.mxu0 0.0
    %318 = vmatmul.mubr.f32.gmra.mxu0 %v246
    %v319 = vpop.f32.mrf.mxu0
    %v320 = vadd.f32 %v239, %v319
    %v321 = vpop.f32.mrf.mxu0
    %322 = vdwg.mxu0
    %vm323 = vcmp.ge.f32.partialorder %v315, 0.0
    %vm324 = vcmp.ge.f32.partialorder %v320, 0.0
    %v325 = vmul.f32 %v315, 0.1
    %v326 = vmul.f32 %v320, 0.1
    %v327 = vsel %vm323, %v315, %v325
    %v328 = vsel %vm324, %v320, %v326
    %v329 = vld [vmem:[%s7] sm:$0xff]
    %v330 = vld [vmem:[%s7 + $0x8] sm:$0xff]
    %v331 = vld [vmem:[%s7 + $0x10] sm:$0xff]
    %v332 = vld [vmem:[%s7 + $0x18] sm:$0xff]
    %v333 = vld [vmem:[%s8] sm:$0x1]
    %v335 = vlaneseq
    %v336 = vshrl.u32 %v335, 7
    %v337 = vsub.s32 0, %v336
    %v338 = vrot.slane %v333, %v337
    %v341 = vsel %vm241, %v327, 0
    %v344 = vsel %vm241, %v328, 0
    %346 = vmatprep.subr.mxu0 0.0
    %347 = vmatpush1.msra.mxu0 0.0
    %348 = vmatprep.subr.mxu0 0.0
    %349 = vmatpush1.msra.mxu0 0.0
    %350 = vmatprep.subr.mxu0 0.0
    %351 = vmatpush1.msra.mxu0 0.0
    %352 = vmatprep.subr.mxu0 0.0
    %353 = vmatpush1.msra.mxu0 0.0
    %354 = vmatprep.subr.mxu0 0.0
    %355 = vmatpush1.msra.mxu0 0.0
    %356 = vmatprep.subr.mxu0 0.0
    %357 = vmatpush1.msra.mxu0 0.0
    %358 = vmatprep.subr.mxu0 0.0
    %359 = vmatpush1.msra.mxu0 0.0
    %360 = vmatprep.subr.mxu0 0.0
    %361 = vmatpush1.msra.mxu0 0.0
    %362 = vmatprep.subr.mxu0 0.0
    %363 = vmatpush1.msra.mxu0 0.0
    %364 = vmatprep.subr.mxu0 0.0
    %365 = vmatpush1.msra.mxu0 0.0
    %366 = vmatprep.subr.mxu0 0.0
    %367 = vmatpush1.msra.mxu0 0.0
    %368 = vmatprep.subr.mxu0 0.0
    %369 = vmatpush1.msra.mxu0 0.0
    %370 = vmatprep.subr.mxu0 0.0
    %371 = vmatpush1.msra.mxu0 %v332
    %372 = vmatprep.subr.mxu0 0.0
    %373 = vmatpush1.msra.mxu0 %v331
    %374 = vmatprep.subr.mxu0 0.0
    %375 = vmatpush1.msra.mxu0 %v330
    %376 = vmatprep.subr.mxu0 0.0
    %377 = vmatpush1.msra.mxu0 %v329
    %378 = vmatprep.subr.mxu0 0.0
    %379 = vmatpush2.msra.mxu0 0.0
    %380 = vmatprep.subr.mxu0 0.0
    %381 = vmatpush2.msra.mxu0 0.0
    %382 = vmatprep.subr.mxu0 0.0
    %383 = vmatpush2.msra.mxu0 0.0
    %384 = vmatprep.subr.mxu0 0.0
    %385 = vmatpush2.msra.mxu0 0.0
    %386 = vmatprep.subr.mxu0 0.0
    %387 = vmatpush2.msra.mxu0 0.0
    %388 = vmatprep.subr.mxu0 0.0
    %389 = vmatpush2.msra.mxu0 0.0
    %390 = vmatprep.subr.mxu0 0.0
    %391 = vmatpush2.msra.mxu0 0.0
    %392 = vmatprep.subr.mxu0 0.0
    %393 = vmatpush2.msra.mxu0 0.0
    %394 = vmatprep.subr.mxu0 0.0
    %395 = vmatpush2.msra.mxu0 0.0
    %396 = vmatprep.subr.mxu0 0.0
    %397 = vmatpush2.msra.mxu0 0.0
    %398 = vmatprep.subr.mxu0 0.0
    %399 = vmatpush2.msra.mxu0 0.0
    %400 = vmatprep.subr.mxu0 0.0
    %401 = vmatpush2.msra.mxu0 0.0
    %402 = vmatprep.subr.mxu0 0.0
    %403 = vmatpush2.msra.mxu0 0.0
    %404 = vmatprep.subr.mxu0 0.0
    %405 = vmatpush2.msra.mxu0 0.0
    %406 = vmatprep.subr.mxu0 0.0
    %407 = vmatpush2.msra.mxu0 0.0
    %408 = vmatprep.subr.mxu0 0.0
    %409 = vmatpush2.msra.mxu0 0.0
    %410 = vmatprep.mubr.f32.mxu0 0.0
    %411 = vmatmul.mubr.f32.gmra.mxu0 %v341
    %v412 = vpop.f32.mrf.mxu0
    %v413 = vadd.f32 %v338, %v412
    %v414 = vpop.f32.mrf.mxu0
    %415 = vmatprep.mubr.f32.mxu0 0.0
    %416 = vmatmul.mubr.f32.gmra.mxu0 %v344
    %v417 = vpop.f32.mrf.mxu0
    %v418 = vadd.f32 %v338, %v417
    %v419 = vpop.f32.mrf.mxu0
    %420 = vdwg.mxu0
    %421 = vst.msk [vmem:[%s9] sm:$0xff] %vm51, %v413
    %422 = vst.msk [vmem:[%s9 + $0x8] sm:$0xff] %vm51, %v418
    // Predicated region
    $region42: #{tpu_custom_call.1} parent=1 // pred_check
      _
    $region43: #{tpu_custom_call.1} parent=1 // pred_check_branch
      %424 = sbr.rel (0) target = $region45
    $region44: #{tpu_custom_call.1} parent=1 // pred_region
      _
    $region45: #{tpu_custom_call.1} parent=1 // pred_fallthru
      _
    // Predicated region
    $region46: #{tpu_custom_call.1} parent=1 // pred_check
      _
    $region47: #{tpu_custom_call.1} parent=1 // pred_check_branch
      %426 = sbr.rel (0) target = $region49
    $region48: #{tpu_custom_call.1} parent=1 // pred_region
      _
    $region49: #{tpu_custom_call.1} parent=1 // pred_fallthru
      _
    %427 = vsyncpa [#allocation3], 1

</llo_original>
